<compile_context>
chip_gen: v5e
topology: v5e:2x2
jax: 0.10.0
libtpu: 0.0.40
codegen_flags: <defaults>
</compile_context>

<pallas_src>
import functools

import jax
import jax.numpy as jnp
from jax import lax
from jax.experimental import pallas as pl
from jax.experimental.pallas import tpu as pltpu


def _cdiv(a, b):
    return -(-a // b)


def _focal_loss_kernel(*refs, gamma, hw, tn, k_per, k_total, inv_denom,
                       has_alpha, needs_mask):
    if has_alpha:
        x_ref, t_ref, a_ref, out_ref, acc_ref = refs
    else:
        x_ref, t_ref, out_ref, acc_ref = refs
        a_ref = None

    pi = pl.program_id(1)
    ki = pl.program_id(2)

    @pl.when(ki == 0)
    def _():
        acc_ref[...] = jnp.zeros_like(acc_ref)

    x = x_ref[...].astype(jnp.float32)          # (bb, C, tn) logits
    t = t_ref[...].astype(jnp.int32)            # (bb, 1, tn) class ids
    bb, num_classes, _ = x.shape

    # One-hot select of the target class: (1, C, 1) iota broadcast against t.
    cls_ids = lax.broadcasted_iota(jnp.int32, (1, num_classes, 1), 1)
    sel = cls_ids == t                          # (bb, C, tn) bool

    # log_softmax over the class (sublane) axis; pt is recovered from the
    # already-computed exponentials (no second exp transcendental).
    m = jnp.max(x, axis=1, keepdims=True)                       # (bb, 1, tn)
    e = jnp.exp(x - m)                                          # (bb, C, tn)
    s = jnp.sum(e, axis=1, keepdims=True)                       # (bb, 1, tn)
    e_t = jnp.sum(jnp.where(sel, e, 0.0), axis=1, keepdims=True)
    x_t = jnp.sum(jnp.where(sel, x, 0.0), axis=1, keepdims=True)
    logpt = x_t - m - jnp.log(s)                                # (bb, 1, tn)
    pt = e_t / s                                                # == exp(logpt)

    if has_alpha:
        at = jnp.sum(jnp.where(sel, a_ref[...], 0.0), axis=1, keepdims=True)
        logpt = logpt * at

    if gamma == 2.0:            # default path: two multiplies, no pow
        omp = 1.0 - pt
        mod = omp * omp
    elif gamma == 0.0:
        mod = jnp.ones_like(pt)
    else:                       # clamp so fractional gamma never sees a tiny negative
        mod = jnp.maximum(1.0 - pt, 0.0) ** gamma
    loss = -mod * logpt                                         # (bb, 1, tn)

    if needs_mask:
        gk = pi * k_per + ki    # global lane-tile index (may run past hw)

        @pl.when(gk < k_total - 1)          # fully in-range tiles: no mask ops
        def _():
            acc_ref[...] += loss

        @pl.when(gk >= k_total - 1)         # ragged / fully out-of-range tiles
        def _():
            col = gk * tn + lax.broadcasted_iota(jnp.int32, (1, 1, tn), 2)
            acc_ref[...] += jnp.where(col < hw, loss, 0.0)
    else:
        acc_ref[...] += loss

    @pl.when(ki == k_per - 1)
    def _():
        part = jnp.sum(acc_ref[...], axis=2, keepdims=True)     # (bb, 1, 1)
        out_ref[...] = (part * inv_denom).reshape(1, 1, bb, 1)


class FocalLoss:
    """Mirrors the PyTorch FocalLoss: log_softmax over classes, gather of the
    target class, optional alpha class weighting, (1 - pt)^gamma modulation,
    mean (size_average=True) or sum reduction."""

    # TODO(synk): cfg.LOSS.CLASS_WEIGHT is not available in this script; alpha
    # is taken from the constructor argument only.
    def __init__(self, gamma=2.0, alpha=None, size_average=True):
        self.gamma = float(gamma)
        if isinstance(alpha, (float, int)) and not isinstance(alpha, bool):
            alpha = [float(alpha), 1.0 - float(alpha)]
        if isinstance(alpha, (list, tuple)):
            alpha = tuple(float(a) for a in alpha)
        self.alpha = alpha
        self.size_average = size_average

    def __call__(self, logits, target):
        b, c = int(logits.shape[0]), int(logits.shape[1])
        hw = 1
        for d in logits.shape[2:]:
            hw *= int(d)
        if self.alpha is not None and len(self.alpha) != c:
            raise ValueError("alpha length must equal the number of classes")

        # Native NCHW layout: class axis on sublanes, spatial axis on lanes.
        # Metadata-only reshapes; dtype casts happen in-kernel.
        x = logits.reshape(b, c, hw)
        t = target.reshape(b, 1, hw)

        # ----- tile-size selection ------------------------------------------
        x_bytes = jnp.dtype(logits.dtype).itemsize
        t_bytes = jnp.dtype(target.dtype).itemsize
        bytes_per_col = c * x_bytes + t_bytes
        TARGET_STEP_BYTES = 512 * 1024          # ~85%+ of HBM roofline per step
        row_bytes = hw * bytes_per_col

        if row_bytes <= TARGET_STEP_BYTES:
            tn = hw                              # full-extent lane block
            k_total = 1
            bb_target = max(1, TARGET_STEP_BYTES // max(row_bytes, 1))
        else:
            tn = max(128, (TARGET_STEP_BYTES // bytes_per_col) // 128 * 128)
            k_total = _cdiv(hw, tn)
            bb_target = 1

        # Batch several images per step when HW is small, but keep >= 2 batch
        # blocks when b >= 2 so the "parallel" batch axis can feed both
        # TensorCores on v7x.
        bb_cap = b if b == 1 else max(1, b // 2)
        bb_goal = max(1, min(bb_target, bb_cap, b))
        bb = 1
        for d in range(1, b + 1):
            if b % d == 0 and d <= bb_goal:
                bb = d
        n_bb = b // bb

        # Split HW into two parallel super-chunks when B == 1 (v7x: 2 TCs).
        P = 2 if (b == 1 and k_total >= 2) else 1
        k_per = _cdiv(k_total, P)
        needs_mask = (P * k_per * tn != hw)

        n_total = b * hw
        inv_denom = (1.0 / float(n_total)) if self.size_average else 1.0
        has_alpha = self.alpha is not None

        # Clamp the lane-tile index when the P-split overshoots (fully
        # out-of-range tiles re-read the last block; the kernel masks them).
        if P * k_per > k_total:
            k_last = k_total - 1

            def kmap(bi, pi, ki):
                return (bi, 0, jnp.minimum(pi * k_per + ki, k_last))
        else:
            def kmap(bi, pi, ki):
                return (bi, 0, pi * k_per + ki)

        in_specs = [
            pl.BlockSpec((bb, c, tn), kmap),
            pl.BlockSpec((bb, 1, tn), kmap),
        ]
        args = [x, t]
        if has_alpha:
            a_arr = jnp.asarray(self.alpha, jnp.float32).reshape(1, c, 1)
            in_specs.append(pl.BlockSpec((1, c, 1), lambda bi, pi, ki: (0, 0, 0)))
            args.append(a_arr)

        kernel = functools.partial(
            _focal_loss_kernel,
            gamma=self.gamma, hw=hw, tn=tn, k_per=k_per, k_total=k_total,
            inv_denom=inv_denom, has_alpha=has_alpha, needs_mask=needs_mask)

        # Explicit scoped-VMEM limit (v5e default is only 16 MiB); stays well
        # under v7x's 64 MiB physical VMEM.
        step_bytes = bb * tn * bytes_per_col
        vmem_limit = int(min(40 << 20, max(16 << 20, 6 * step_bytes + (8 << 20))))

        partials = pl.pallas_call(
            kernel,
            out_shape=jax.ShapeDtypeStruct((n_bb, P, bb, 1), jnp.float32),
            grid_spec=pltpu.PrefetchScalarGridSpec(
                num_scalar_prefetch=0,
                grid=(n_bb, P, k_per),
                in_specs=in_specs,
                out_specs=pl.BlockSpec((1, 1, bb, 1),
                                       lambda bi, pi, ki: (bi, pi, 0, 0)),
                scratch_shapes=[pltpu.VMEM((bb, 1, tn), jnp.float32)],
            ),
            compiler_params=pltpu.CompilerParams(
                dimension_semantics=("parallel", "parallel", "arbitrary"),
                vmem_limit_bytes=vmem_limit,
            ),
        )(*args)

        return jnp.sum(partials)


def _reference_focal(logits, target, gamma=2.0, alpha=None, size_average=True):
    """Pure-JAX reference matching the PyTorch forward."""
    b, c = logits.shape[0], logits.shape[1]
    x = logits.reshape(b, c, -1).transpose(0, 2, 1).reshape(-1, c).astype(jnp.float32)
    t = target.reshape(-1).astype(jnp.int32)
    logpt_all = jax.nn.log_softmax(x, axis=1)
    logpt = jnp.take_along_axis(logpt_all, t[:, None], axis=1)[:, 0]
    pt = jnp.exp(logpt)
    if alpha is not None:
        a = jnp.asarray(alpha, jnp.float32)
        logpt = logpt * a[t]
    loss = -((1.0 - pt) ** gamma) * logpt
    return loss.mean() if size_average else loss.sum()


if __name__ == "__main__":
    key = jax.random.PRNGKey(0)
    k1, k2, k3, k4, k5, k6 = jax.random.split(key, 6)

    # --- test 1: default config (gamma=2, no alpha, mean), B=2 C=4 16x16 ----
    B, C, H, W = 2, 4, 16, 16
    logits = jax.random.normal(k1, (B, C, H, W), dtype=jnp.float32)
    target = jax.random.randint(k2, (B, H, W), 0, C, dtype=jnp.int32)
    loss = FocalLoss(gamma=2.0, alpha=None, size_average=True)(logits, target)
    jax.block_until_ready(loss)
    ref = _reference_focal(logits, target, gamma=2.0, alpha=None, size_average=True)
    assert jnp.allclose(loss, ref, rtol=1e-5, atol=1e-6), (loss, ref)

    # --- test 2: alpha-weighted, sum reduction (same inputs) ----------------
    alpha = [0.25, 0.75, 0.5, 0.5]
    loss2 = FocalLoss(gamma=2.0, alpha=alpha, size_average=False)(logits, target)
    jax.block_until_ready(loss2)
    ref2 = _reference_focal(logits, target, gamma=2.0, alpha=alpha, size_average=False)
    assert jnp.allclose(loss2, ref2, rtol=1e-4, atol=1e-4), (loss2, ref2)

    # --- test 3: multi-image batch block (bb=2), fractional gamma -----------
    B3, C3, H3, W3 = 4, 4, 8, 8
    logits3 = jax.random.normal(k3, (B3, C3, H3, W3), dtype=jnp.float32)
    target3 = jax.random.randint(k4, (B3, H3, W3), 0, C3, dtype=jnp.int32)
    loss3 = FocalLoss(gamma=1.5, alpha=alpha, size_average=True)(logits3, target3)
    jax.block_until_ready(loss3)
    ref3 = _reference_focal(logits3, target3, gamma=1.5, alpha=alpha, size_average=True)
    assert jnp.allclose(loss3, ref3, rtol=1e-5, atol=1e-6), (loss3, ref3)

    # --- test 4: B=1 large image: big lane tiles, 2-way parallel HW split ---
    B4, C4, H4, W4 = 1, 3, 200, 200
    logits4 = jax.random.normal(k5, (B4, C4, H4, W4), dtype=jnp.float32)
    target4 = jax.random.randint(k6, (B4, H4, W4), 0, C4, dtype=jnp.int32)
    loss4 = FocalLoss(gamma=2.0, alpha=None, size_average=True)(logits4, target4)
    jax.block_until_ready(loss4)
    ref4 = _reference_focal(logits4, target4, gamma=2.0, alpha=None, size_average=True)
    assert jnp.allclose(loss4, ref4, rtol=2e-5, atol=1e-6), (loss4, ref4)

    print("KERNEL_OK")
</pallas_src>

<mosaic_0001>
module attributes {stable_mosaic.version = 11 : i64} {
  func.func @_focal_loss_kernel(%arg0: i32, %arg1: i32, %arg2: i32, %arg3: memref<1x4x256xf32, #tpu.memory_space<vmem>>, %arg4: memref<1x1x256xi32, #tpu.memory_space<vmem>>, %arg5: memref<1x1x1x1xf32, #tpu.memory_space<vmem>>, %arg6: memref<1x1x256xf32, #tpu.memory_space<vmem>>) attributes {dimension_semantics = [#tpu.dimension_semantics<parallel>, #tpu.dimension_semantics<parallel>, #tpu.dimension_semantics<arbitrary>], iteration_bounds = array<i64: 2, 1, 1>, scalar_prefetch = 0 : i64, scratch_operands = 1 : i64, tpu.core_type = #tpu.core_type<tc>, window_params = [{transform_indices = @transform_0, window_bounds = array<i64: 1, 4, 256>}, {transform_indices = @transform_1, window_bounds = array<i64: 1, 1, 256>}, {transform_indices = @transform_2, window_bounds = array<i64: 1, 1, 1, 1>}]} {
    %c0_i32 = arith.constant 0 : i32
    %0 = arith.cmpi eq, %arg2, %c0_i32 : i32
    %1 = arith.extui %0 : i1 to i32
    %c0_i32_0 = arith.constant 0 : i32
    %2 = arith.cmpi ne, %1, %c0_i32_0 : i32
    scf.if %2 {
      %cst_21 = arith.constant 0.000000e+00 : f32
      %40 = vector.broadcast %cst_21 : f32 to vector<1x1x256xf32>
      %c0_22 = arith.constant 0 : index
      %c0_23 = arith.constant 0 : index
      %c0_24 = arith.constant 0 : index
      %41 = vector.load %arg6[%c0_22, %c0_23, %c0_24] : memref<1x1x256xf32, #tpu.memory_space<vmem>>, vector<1x1x256xf32>
      tpu.vector_store %arg6[%c0_22, %c0_23, %c0_24], %40 {strides = array<i32>} : memref<1x1x256xf32, #tpu.memory_space<vmem>>, vector<1x1x256xf32>,
    } else {
    }
    %c0 = arith.constant 0 : index
    %c0_1 = arith.constant 0 : index
    %c0_2 = arith.constant 0 : index
    %3 = vector.load %arg3[%c0, %c0_1, %c0_2] : memref<1x4x256xf32, #tpu.memory_space<vmem>>, vector<1x4x256xf32>
    %c0_3 = arith.constant 0 : index
    %c0_4 = arith.constant 0 : index
    %c0_5 = arith.constant 0 : index
    %4 = vector.load %arg4[%c0_3, %c0_4, %c0_5] : memref<1x1x256xi32, #tpu.memory_space<vmem>>, vector<1x1x256xi32>
    %5 = tpu.iota {dimensions = array<i32: 1>} : vector<1x4x1xi32>
    %6 = vector.broadcast %5 : vector<1x4x1xi32> to vector<1x4x256xi32>
    %7 = vector.broadcast %4 : vector<1x1x256xi32> to vector<1x4x256xi32>
    %8 = arith.cmpi eq, %6, %7 : vector<1x4x256xi32>
    %cst = arith.constant dense<0xFF800000> : vector<1x256xf32>
    %9 = vector.multi_reduction <maximumf>, %3, %cst [1] : vector<1x4x256xf32> to vector<1x256xf32>
    %10 = vector.shape_cast %9 : vector<1x256xf32> to vector<1x1x256xf32>
    %11 = vector.broadcast %10 : vector<1x1x256xf32> to vector<1x4x256xf32>
    %12 = arith.subf %3, %11 : vector<1x4x256xf32>
    %13 = math.exp %12 : vector<1x4x256xf32>
    %cst_6 = arith.constant dense<0.000000e+00> : vector<1x256xf32>
    %14 = vector.multi_reduction <add>, %13, %cst_6 [1] : vector<1x4x256xf32> to vector<1x256xf32>
    %15 = vector.shape_cast %14 : vector<1x256xf32> to vector<1x1x256xf32>
    %cst_7 = arith.constant 0.000000e+00 : f32
    %16 = vector.broadcast %cst_7 : f32 to vector<1x4x256xf32>
    %17 = arith.select %8, %13, %16 : vector<1x4x256xi1>, vector<1x4x256xf32>
    %cst_8 = arith.constant dense<0.000000e+00> : vector<1x256xf32>
    %18 = vector.multi_reduction <add>, %17, %cst_8 [1] : vector<1x4x256xf32> to vector<1x256xf32>
    %19 = vector.shape_cast %18 : vector<1x256xf32> to vector<1x1x256xf32>
    %cst_9 = arith.constant 0.000000e+00 : f32
    %20 = vector.broadcast %cst_9 : f32 to vector<1x4x256xf32>
    %21 = arith.select %8, %3, %20 : vector<1x4x256xi1>, vector<1x4x256xf32>
    %cst_10 = arith.constant dense<0.000000e+00> : vector<1x256xf32>
    %22 = vector.multi_reduction <add>, %21, %cst_10 [1] : vector<1x4x256xf32> to vector<1x256xf32>
    %23 = vector.shape_cast %22 : vector<1x256xf32> to vector<1x1x256xf32>
    %24 = arith.subf %23, %10 : vector<1x1x256xf32>
    %25 = math.log %15 : vector<1x1x256xf32>
    %26 = arith.subf %24, %25 : vector<1x1x256xf32>
    %27 = arith.divf %19, %15 : vector<1x1x256xf32>
    %cst_11 = arith.constant 1.000000e+00 : f32
    %28 = vector.broadcast %cst_11 : f32 to vector<1x1x256xf32>
    %29 = arith.subf %28, %27 : vector<1x1x256xf32>
    %30 = arith.mulf %29, %29 : vector<1x1x256xf32>
    %cst_12 = arith.constant 0.000000e+00 : f32
    %31 = vector.broadcast %cst_12 : f32 to vector<1x1x256xf32>
    %32 = arith.subf %31, %30 : vector<1x1x256xf32>
    %33 = arith.mulf %32, %26 : vector<1x1x256xf32>
    %c0_13 = arith.constant 0 : index
    %c0_14 = arith.constant 0 : index
    %c0_15 = arith.constant 0 : index
    %34 = vector.load %arg6[%c0_13, %c0_14, %c0_15] : memref<1x1x256xf32, #tpu.memory_space<vmem>>, vector<1x1x256xf32>
    %35 = arith.addf %34, %33 : vector<1x1x256xf32>
    %c0_16 = arith.constant 0 : index
    %c0_17 = arith.constant 0 : index
    %c0_18 = arith.constant 0 : index
    %36 = vector.load %arg6[%c0_16, %c0_17, %c0_18] : memref<1x1x256xf32, #tpu.memory_space<vmem>>, vector<1x1x256xf32>
    tpu.vector_store %arg6[%c0_16, %c0_17, %c0_18], %35 {strides = array<i32>} : memref<1x1x256xf32, #tpu.memory_space<vmem>>, vector<1x1x256xf32>,
    %c0_i32_19 = arith.constant 0 : i32
    %37 = arith.cmpi eq, %arg2, %c0_i32_19 : i32
    %38 = arith.extui %37 : i1 to i32
    %c0_i32_20 = arith.constant 0 : i32
    %39 = arith.cmpi ne, %38, %c0_i32_20 : i32
    scf.if %39 {
      %c0_21 = arith.constant 0 : index
      %c0_22 = arith.constant 0 : index
      %c0_23 = arith.constant 0 : index
      %40 = vector.load %arg6[%c0_21, %c0_22, %c0_23] : memref<1x1x256xf32, #tpu.memory_space<vmem>>, vector<1x1x256xf32>
      %cst_24 = arith.constant dense<0.000000e+00> : vector<1x1xf32>
      %41 = vector.multi_reduction <add>, %40, %cst_24 [2] : vector<1x1x256xf32> to vector<1x1xf32>
      %42 = vector.shape_cast %41 : vector<1x1xf32> to vector<1x1x1xf32>
      %cst_25 = arith.constant 0.001953125 : f32
      %43 = vector.broadcast %cst_25 : f32 to vector<1x1x1xf32>
      %44 = arith.mulf %42, %43 : vector<1x1x1xf32>
      %45 = vector.shape_cast %44 : vector<1x1x1xf32> to vector<1x1x1x1xf32>
      %c0_26 = arith.constant 0 : index
      %c0_27 = arith.constant 0 : index
      %c0_28 = arith.constant 0 : index
      %c0_29 = arith.constant 0 : index
      %46 = vector.load %arg5[%c0_26, %c0_27, %c0_28, %c0_29] : memref<1x1x1x1xf32, #tpu.memory_space<vmem>>, vector<1x1x1x1xf32>
      tpu.vector_store %arg5[%c0_26, %c0_27, %c0_28, %c0_29], %45 {strides = array<i32>} : memref<1x1x1x1xf32, #tpu.memory_space<vmem>>, vector<1x1x1x1xf32>,
    } else {
    }
    return
  }
  func.func @transform_0(%arg0: i32, %arg1: i32, %arg2: i32) -> (i32, i32, i32) {
    %c1_i32 = arith.constant 1 : i32
    %0 = arith.muli %arg1, %c1_i32 : i32
    %1 = arith.addi %0, %arg2 : i32
    %c0_i32 = arith.constant 0 : i32
    %c0_i32_0 = arith.constant 0 : i32
    return %arg0, %c0_i32, %1 : i32, i32, i32
  }
  func.func @transform_1(%arg0: i32, %arg1: i32, %arg2: i32) -> (i32, i32, i32) {
    %c1_i32 = arith.constant 1 : i32
    %0 = arith.muli %arg1, %c1_i32 : i32
    %1 = arith.addi %0, %arg2 : i32
    %c0_i32 = arith.constant 0 : i32
    %c0_i32_0 = arith.constant 0 : i32
    return %arg0, %c0_i32, %1 : i32, i32, i32
  }
  func.func @transform_2(%arg0: i32, %arg1: i32, %arg2: i32) -> (i32, i32, i32, i32) {
    %c0_i32 = arith.constant 0 : i32
    %c0_i32_0 = arith.constant 0 : i32
    %c0_i32_1 = arith.constant 0 : i32
    return %arg0, %arg1, %c0_i32, %c0_i32_0 : i32, i32, i32, i32
  }
}

</mosaic_0001>

<llo_original>
// kernel: tpu_custom_call.1
$region0: #{tpu_custom_call.1}
  #allocation0 [shape = 'u32[]', space=smem, size = 0x4, offset = 0x4, fixed_abs, tag = 'smem constant byte address 0x4 - core index']
  #allocation1 [shape = 'u32[72,128]{1,0:T(1,128)}', space=vmem, size = 0x9000, scoped, tag = 'internal scratch']
  #allocation2 [shape = 'f32[1,1,256]{2,1,0:T(1,128)}', space=vmem, size = 0x400, scoped, tag = 'scratch operand']
  %s0 = inlined_call_operand.hbm [shape: f32[2,4,256], index: 0, kind: input, shape index: {}]
  %s1 = inlined_call_operand.hbm [shape: s32[2,1,256], index: 1, kind: input, shape index: {}]
  %s2 = inlined_call_operand.vmem [shape: f32[2,1,1,1], index: 2, kind: output, shape index: {}]
  %s3 = sld [smem:[#allocation0]]
  $region57: #{tpu_custom_call.1} parent=0
    _
  %s5 = ssub.s32 1, %s3
  %s6 = scalar_select 0, %s5, %s3
  $region1: #{tpu_custom_call.1} parent=0
    #allocation3 [shape = 'u8[8192]{0}', space=vmem, size = 0x2000, scoped, tag = 'input window, operand 0']
    #allocation4 [shape = 's32[2]{0}', space=sflag, size = 0x8, scoped, tag = 'scoped memory for tpu_custom_call.1']
    #allocation5 [shape = 'u8[2048]{0}', space=vmem, size = 0x800, scoped, tag = 'input window, operand 1']
    #allocation6 [shape = 's32[2]{0}', space=sflag, size = 0x8, scoped, tag = 'scoped memory for tpu_custom_call.1']
    %7 = vsyncpa [#allocation4], 0
    %s8 = scalar_lea.sflag [#allocation4], 1
    %9 = vsyncpa %s8, 0
    %10 = vsyncpa [#allocation6], 0
    %s11 = scalar_lea.sflag [#allocation6], 1
    %12 = vsyncpa %s11, 0
    loop: start=0, step=1, limit=4
    $region2: #{tpu_custom_call.1} parent=1 // loop_pre_header
      _
    $region3: #{tpu_custom_call.1} parent=1 // loop_header
      %s14 = sphi 0, %s18
      %p15 = scmp.ge.s32.totalorder %s14, 4
      %s21 = sphi 0, %s40
      %s22 = sphi 0, %s36
      %s23 = sphi 0, %s32
      %s24 = sphi 0, %s21
      %s25 = sphi 0, %s22
      %s26 = sphi 0, %s23
      %s27 = sphi 0, %s24
      %s28 = sphi 0, %s25
      %s29 = sphi 0, %s26
      %s47 = sphi 0, %s49
      %s50 = sphi 0, %s47
      %s51 = sphi 0, %s50
      %s67 = sphi 0, %s51
      %s77 = sphi 0, %s79
      %s80 = sphi 0, %s77
      %s81 = sphi 0, %s80
      %s97 = sphi 0, %s81
      %s105 = sphi 0, %s107
      %s108 = sphi 0, %s105
      %s109 = sphi 0, %s108
      %s125 = sphi 0, %s109
    $region4: #{tpu_custom_call.1} parent=1 // loop_header_branch
      %17 = sbr.rel (%p15) target = $region8
    $region5: #{tpu_custom_call.1} parent=1 // loop_body
      %s19 = ssub.s32 %s14, 1
      %s20 = ssub.s32 %s14, 2
      %s30 = sadd.s32 1, %s23
      %p31 = scmp.ge.s32.totalorder %s30, 1
      %s32 = scalar_select %p31, 0, %s30
      %s33 = sadd.s32 1, %s22
      %s34 = scalar_select %p31, %s33, %s22
      %p35 = scmp.ge.s32.totalorder %s34, 1
      %s36 = scalar_select %p35, 0, %s34
      %s37 = sadd.s32 1, %s21
      %s38 = scalar_select %p35, %s37, %s21
      %p39 = scmp.ge.s32.totalorder %s38, 2
      %s40 = scalar_select %p39, 0, %s38
      %s41 = sadd.s32 %s22, %s23
      %s42 = sadd.s32 %s36, %s32
      %s43 = ssub.s32 %s21, %s40
      %s44 = ssub.s32 %s41, %s42
      %s45 = sor.u32 %s43, %s44
      %p46 = scmp.eq.s32.totalorder %s45, 0
      %s48 = sadd.s32 %s47, 1
      %s49 = scalar_select %p46, %s47, %s48
      %p52 = pneg %p46
      %p53 = scmp.eq.s32.totalorder %s14, 1
      %p54 = por %p52, %p53
      %p55 = scmp.ne.s32.totalorder %s47, %s50
      %p56 = scmp.eq.s32.totalorder %s14, 0
      %p57 = por %p55, %p56
      %p58 = scmp.ne.s32.totalorder %s47, %s50
      %p59 = scmp.eq.s32.totalorder %s19, 1
      %p60 = por %p58, %p59
      %p61 = scmp.ne.s32.totalorder %s50, %s51
      %p62 = scmp.eq.s32.totalorder %s19, 0
      %p63 = por %p61, %p62
      %p64 = scmp.ne.s32.totalorder %s50, %s51
      %p65 = scmp.eq.s32.totalorder %s20, 1
      %p66 = por %p64, %p65
      %p68 = scmp.ne.s32.totalorder %s51, %s67
      %p69 = scmp.eq.s32.totalorder %s20, 0
      %p70 = por %p68, %p69
      %s71 = sadd.s32 %s22, %s23
      %s72 = sadd.s32 %s36, %s32
      %s73 = ssub.s32 %s21, %s40
      %s74 = ssub.s32 %s71, %s72
      %s75 = sor.u32 %s73, %s74
      %p76 = scmp.eq.s32.totalorder %s75, 0
      %s78 = sadd.s32 %s77, 1
      %s79 = scalar_select %p76, %s77, %s78
      %p82 = pneg %p76
      %p83 = scmp.eq.s32.totalorder %s14, 1
      %p84 = por %p82, %p83
      %p85 = scmp.ne.s32.totalorder %s77, %s80
      %p86 = scmp.eq.s32.totalorder %s14, 0
      %p87 = por %p85, %p86
      %p88 = scmp.ne.s32.totalorder %s77, %s80
      %p89 = scmp.eq.s32.totalorder %s19, 1
      %p90 = por %p88, %p89
      %p91 = scmp.ne.s32.totalorder %s80, %s81
      %p92 = scmp.eq.s32.totalorder %s19, 0
      %p93 = por %p91, %p92
      %p94 = scmp.ne.s32.totalorder %s80, %s81
      %p95 = scmp.eq.s32.totalorder %s20, 1
      %p96 = por %p94, %p95
      %p98 = scmp.ne.s32.totalorder %s81, %s97
      %p99 = scmp.eq.s32.totalorder %s20, 0
      %p100 = por %p98, %p99
      %s101 = ssub.s32 %s21, %s40
      %s102 = ssub.s32 %s22, %s36
      %s103 = sor.u32 %s101, %s102
      %p104 = scmp.eq.s32.totalorder %s103, 0
      %s106 = sadd.s32 %s105, 1
      %s107 = scalar_select %p104, %s105, %s106
      %p110 = pneg %p104
      %p111 = scmp.eq.s32.totalorder %s14, 1
      %p112 = por %p110, %p111
      %p113 = scmp.ne.s32.totalorder %s105, %s108
      %p114 = scmp.eq.s32.totalorder %s14, 0
      %p115 = por %p113, %p114
      %p116 = scmp.ne.s32.totalorder %s105, %s108
      %p117 = scmp.eq.s32.totalorder %s19, 1
      %p118 = por %p116, %p117
      %p119 = scmp.ne.s32.totalorder %s108, %s109
      %p120 = scmp.eq.s32.totalorder %s19, 0
      %p121 = por %p119, %p120
      %p122 = scmp.ne.s32.totalorder %s108, %s109
      %p123 = scmp.eq.s32.totalorder %s20, 1
      %p124 = por %p122, %p123
      %p126 = scmp.ne.s32.totalorder %s109, %s125
      %p127 = scmp.eq.s32.totalorder %s20, 0
      %p128 = por %p126, %p127
      %p129 = scmp.le.s32.totalorder 1, %s14
      %p130 = scmp.lt.s32.totalorder %s14, 3
      %p131 = pnand %p129, %p130
      %p132 = pneg %p131
      // Predicated region
      $region9: #{tpu_custom_call.1} parent=5 // pred_check
        _
      $region10: #{tpu_custom_call.1} parent=5 // pred_check_branch
        %134 = sbr.rel (%p131) target = $region12
      $region11: #{tpu_custom_call.1} parent=5 // pred_region
        %s135 = ssub.s32 %s14, 1
      $region12: #{tpu_custom_call.1} parent=5 // pred_fallthru
        _
      %p136 = scmp.lt.s32.totalorder %s14, 2
      // Predicated region
      $region13: #{tpu_custom_call.1} parent=5 // pred_check
        %p137 = pneg %p136
      $region14: #{tpu_custom_call.1} parent=5 // pred_check_branch
        %139 = sbr.rel (%p137) target = $region16
      $region15: #{tpu_custom_call.1} parent=5 // pred_region
        // Predicated region
        $region17: #{tpu_custom_call.1} parent=15 // pred_check
          %p140 = pneg %p57
        $region18: #{tpu_custom_call.1} parent=15 // pred_check_branch
          %142 = sbr.rel (%p140) target = $region20
        $region19: #{tpu_custom_call.1} parent=15 // pred_region
          %s143 = sand.u32 %s47, 1
          %s144 = scalar_lea.sflag [#allocation4], %s143
          %s145 = sand.u32 %s47, 1
          %s146 = smul.addr %s145, 8
          %s147 = scalar_lea.vmem [#allocation3], %s146
          %s148 = sadd.s32 %s22, %s23
          %s149 = smul.u32 2, %s148
          %151 = vsyncadd %s144, 0
          %s152 = smul.addr %s21, 2
          %s153 = sadd.s32 %s149, %s152
          %s154 = smul.addr %s153, 4
          %s155 = scalar_lea.hbm %s0, %s154
          %s157 = sshll.u32 %s155, 4
          %s158 = int_to_ptr.hbm [resolvable:$true] %s157
          %s159 = sshll.u32 %s147, 4
          %s160 = int_to_ptr.vmem [resolvable:$true] %s159
          %162 = dma.hbm_to_vmem [thread:$0]  %s158, 128, %s160, %s144
        $region20: #{tpu_custom_call.1} parent=15 // pred_fallthru
          _
        // Predicated region
        $region21: #{tpu_custom_call.1} parent=15 // pred_check
          %p163 = pneg %p87
        $region22: #{tpu_custom_call.1} parent=15 // pred_check_branch
          %165 = sbr.rel (%p163) target = $region24
        $region23: #{tpu_custom_call.1} parent=15 // pred_region
          %s166 = sand.u32 %s77, 1
          %s167 = scalar_lea.sflag [#allocation6], %s166
          %s168 = sand.u32 %s77, 1
          %s169 = smul.addr %s168, 2
          %s170 = scalar_lea.vmem [#allocation5], %s169
          %s171 = sadd.s32 %s22, %s23
          %s172 = smul.u32 2, %s171
          %174 = vsyncadd %s167, 0
          %s175 = smul.addr %s21, 2
          %s176 = sadd.s32 %s172, %s175
          %s177 = scalar_lea.hbm %s1, %s176
          %s179 = sshll.u32 %s177, 4
          %s180 = int_to_ptr.hbm [resolvable:$true] %s179
          %s181 = sshll.u32 %s170, 4
          %s182 = int_to_ptr.vmem [resolvable:$true] %s181
          %184 = dma.hbm_to_vmem [thread:$0]  %s180, 32, %s182, %s167
        $region24: #{tpu_custom_call.1} parent=15 // pred_fallthru
          _
      $region16: #{tpu_custom_call.1} parent=5 // pred_fallthru
        _
      %p185 = scmp.le.s32.totalorder 1, %s14
      %p186 = scmp.lt.s32.totalorder %s14, 3
      %p187 = pnand %p185, %p186
      %p188 = pneg %p187
      // Predicated region
      $region25: #{tpu_custom_call.1} parent=5 // pred_check
        _
      $region26: #{tpu_custom_call.1} parent=5 // pred_check_branch
        %190 = sbr.rel (%p187) target = $region28
      $region27: #{tpu_custom_call.1} parent=5 // pred_region
        %s191 = ssub.s32 %s14, 1
        %s192 = sand.u32 %s50, 1
        %s193 = scalar_lea.sflag [#allocation4], %s192
        %s194 = sand.u32 %s50, 1
        %s195 = smul.addr %s194, 8
        %s196 = scalar_lea.vmem [#allocation3], %s195
        // Predicated region
        $region29: #{tpu_custom_call.1} parent=27 // pred_check
          %p197 = pneg %p63
        $region30: #{tpu_custom_call.1} parent=27 // pred_check_branch
          %199 = sbr.rel (%p197) target = $region32
        $region31: #{tpu_custom_call.1} parent=27 // pred_region
          %201 = dma.done %s193, 128
        $region32: #{tpu_custom_call.1} parent=27 // pred_fallthru
          _
        %s202 = sand.u32 %s80, 1
        %s203 = scalar_lea.sflag [#allocation6], %s202
        %s204 = sand.u32 %s80, 1
        %s205 = smul.addr %s204, 2
        %s206 = scalar_lea.vmem [#allocation5], %s205
        // Predicated region
        $region33: #{tpu_custom_call.1} parent=27 // pred_check
          %p207 = pneg %p93
        $region34: #{tpu_custom_call.1} parent=27 // pred_check_branch
          %209 = sbr.rel (%p207) target = $region36
        $region35: #{tpu_custom_call.1} parent=27 // pred_region
          %211 = dma.done %s203, 32
        $region36: #{tpu_custom_call.1} parent=27 // pred_fallthru
          _
        %s212 = sand.u32 %s50, 1
        %s213 = scalar_lea.sflag [#allocation4], %s212
        %s214 = sand.u32 %s50, 1
        %s215 = smul.addr %s214, 8
        %s216 = scalar_lea.vmem [#allocation3], %s215
        %p217 = pneg %p63
        %p218 = pneg %p60
        %s219 = sand.u32 %s80, 1
        %s220 = scalar_lea.sflag [#allocation6], %s219
        %s221 = sand.u32 %s80, 1
        %s222 = smul.addr %s221, 2
        %s223 = scalar_lea.vmem [#allocation5], %s222
        %p224 = pneg %p93
        %p225 = pneg %p90
        %p226 = pneg %p121
        %p227 = pneg %p118
        %p228 = scmp.lt.s32.totalorder %s24, 1
        %s229 = scalar_select %p228, %s24, 1
        %p230 = scmp.lt.s32.totalorder %s25, 0
        %s231 = scalar_select %p230, %s25, 0
        %s232 = sadd.s32 %s231, %s229
        %s233 = scalar_lea.vmem %s2, %s232
        %s234 = sadd.s32 %s25, %s26
        %s235 = smul.u32 2, %s234
        %s236 = sadd.s32 %s25, %s26
        %s237 = smul.u32 2, %s236
        %p238 = scmp.lt.s32.totalorder %s24, 1
        %s239 = scalar_select %p238, %s24, 1
        %p240 = scmp.lt.s32.totalorder %s25, 0
        %s241 = scalar_select %p240, %s25, 0
        %s242 = sadd.s32 %s241, %s239
        %s243 = scalar_lea.vmem %s2, %s242
        %p244 = scmp.eq.s32.totalorder %s26, 0
        // Predicated region
        $region37: #{tpu_custom_call.1} parent=27 // pred_check
          %p245 = pneg %p244
        $region38: #{tpu_custom_call.1} parent=27 // pred_check_branch
          %247 = sbr.rel (%p245) target = $region40
        $region39: #{tpu_custom_call.1} parent=27 // pred_region
          %v248 = vlaneseq
          %vm249 = vcmp.ge.s32.totalorder %v248, 0
          %vm250 = vcmp.lt.s32.totalorder %v248, 256
          %vm251 = vmand %vm249, %vm250
          %252 = vst.msk [vmem:[#allocation2] sm:$0x3] %vm251, 0.0
        $region40: #{tpu_custom_call.1} parent=27 // pred_fallthru
          _
        %v253 = vld [vmem:[%s196] sm:$0xff]
        %v254 = vld [vmem:[%s206] sm:$0x3]
        %v255 = vlaneseq
        %v256 = vshrl.u32 %v255, 7
        %v257 = vperm.slane %v254, 0
        %v258 = vperm.slane %v254, 1
        %vm259 = vcmp.eq.s32.totalorder %v256, %v257
        %vm260 = vcmp.eq.s32.totalorder %v256, %v258
        %262 = vst [vmem:[#allocation1] ss:$2 sm:$0xff] %v253
        %v263 = vld.sshfl [vmem:[#allocation1] sm:$0xff pattern:$0x75316420]
        %v264 = vld.sshfl [vmem:[#allocation1 + $0x8] sm:$0xff pattern:$0x75316420]
        %vm267 = vcmask 1043456
        %v268 = vsel %vm267, %v263, -inf
        %v269 = vrot.slane %v268, 4
        %v270 = vmax.f32 %v268, %v269
        %v271 = vrot.slane %v270, 2
        %v272 = vmax.f32 %v270, %v271
        %v273 = vrot.slane %v272, 1
        %v274 = vmax.f32 %v272, %v273
        %v275 = vsel %vm267, %v264, -inf
        %v276 = vrot.slane %v275, 4
        %v277 = vmax.f32 %v275, %v276
        %v278 = vrot.slane %v277, 2
        %v279 = vmax.f32 %v277, %v278
        %v280 = vrot.slane %v279, 1
        %v281 = vmax.f32 %v279, %v280
        %v284 = vrot.slane %v281, 4
        %v285 = vsel %vm267, %v274, %v284
        %v287 = vsub.f32 %v253, %v285
        %v288 = vmul.f32 %v287, 1.442695
        %v289 = vpow.pop %v288
        %291 = vst [vmem:[#allocation1] ss:$2 sm:$0xff] %v289
        %v292 = vld.sshfl [vmem:[#allocation1] sm:$0xff pattern:$0x75316420]
        %v293 = vld.sshfl [vmem:[#allocation1 + $0x8] sm:$0xff pattern:$0x75316420]
        %v296 = vsel %vm267, %v292, 0.0
        %v297 = vrot.slane %v296, 4
        %v298 = vadd.f32 %v296, %v297
        %v299 = vrot.slane %v298, 2
        %v300 = vadd.f32 %v298, %v299
        %v301 = vrot.slane %v300, 1
        %v302 = vadd.f32 %v300, %v301
        %v303 = vsel %vm267, %v293, 0.0
        %v304 = vrot.slane %v303, 4
        %v305 = vadd.f32 %v303, %v304
        %v306 = vrot.slane %v305, 2
        %v307 = vadd.f32 %v305, %v306
        %v308 = vrot.slane %v307, 1
        %v309 = vadd.f32 %v307, %v308
        %310 = vst [vmem:[#allocation1] ss:$2 sm:$0xff] %v289
        %v311 = vld.sshfl [vmem:[#allocation1] sm:$0xff pattern:$0x75316420]
        %v312 = vld.sshfl [vmem:[#allocation1 + $0x8] sm:$0xff pattern:$0x75316420]
        %v315 = vsel %vm259, %v311, 0.0
        %v316 = vsel %vm260, %v312, 0.0
        %v317 = vsel %vm267, %v315, 0.0
        %v318 = vrot.slane %v317, 4
        %v319 = vadd.f32 %v317, %v318
        %v320 = vrot.slane %v319, 2
        %v321 = vadd.f32 %v319, %v320
        %v322 = vrot.slane %v321, 1
        %v323 = vadd.f32 %v321, %v322
        %v324 = vsel %vm267, %v316, 0.0
        %v325 = vrot.slane %v324, 4
        %v326 = vadd.f32 %v324, %v325
        %v327 = vrot.slane %v326, 2
        %v328 = vadd.f32 %v326, %v327
        %v329 = vrot.slane %v328, 1
        %v330 = vadd.f32 %v328, %v329
        %331 = vst [vmem:[#allocation1] ss:$2 sm:$0xff] %v253
        %v332 = vld.sshfl [vmem:[#allocation1] sm:$0xff pattern:$0x75316420]
        %v333 = vld.sshfl [vmem:[#allocation1 + $0x8] sm:$0xff pattern:$0x75316420]
        %v336 = vsel %vm259, %v332, 0.0
        %v337 = vsel %vm260, %v333, 0.0
        %v338 = vsel %vm267, %v336, 0.0
        %v339 = vrot.slane %v338, 4
        %v340 = vadd.f32 %v338, %v339
        %v341 = vrot.slane %v340, 2
        %v342 = vadd.f32 %v340, %v341
        %v343 = vrot.slane %v342, 1
        %v344 = vadd.f32 %v342, %v343
        %v345 = vsel %vm267, %v337, 0.0
        %v346 = vrot.slane %v345, 4
        %v347 = vadd.f32 %v345, %v346
        %v348 = vrot.slane %v347, 2
        %v349 = vadd.f32 %v347, %v348
        %v350 = vrot.slane %v349, 1
        %v351 = vadd.f32 %v349, %v350
        %v352 = vsub.f32 %v344, %v274
        %v353 = vsub.f32 %v351, %v281
        %v354 = vlog2.pop %v302
        %v355 = vmul.f32 %v354, 0.6931472
        %v356 = vlog2.pop %v309
        %v357 = vmul.f32 %v356, 0.6931472
        %v358 = vsub.f32 %v352, %v355
        %v359 = vsub.f32 %v353, %v357
        %v360 = vrcp.pop %v302
        %v361 = vmul.f32 %v302, %v360
        %v362 = vsub.f32 1.0, %v361
        %v363 = vmul.f32 %v360, %v362
        %v364 = vadd.f32 %v360, %v363
        %vm365 = vweird.f32 %v302
        %vm366 = vweird.f32 %v360
        %vm367 = vmor %vm365, %vm366
        %v368 = vsel %vm367, %v360, %v364
        %v369 = vand.u32 2147483647, %v302
        %vm370 = vcmp.eq.f32.partialorder %v369, 8.507059e+37
        %v371 = vand.u32 %v302, 2147483648
        %v372 = vor.u32 1.1754944e-38, %v371
        %v373 = vsel %vm370, %v372, %v368
        %v374 = vmul.f32 %v323, %v373
        %v375 = vrcp.pop %v309
        %v376 = vmul.f32 %v309, %v375
        %v377 = vsub.f32 1.0, %v376
        %v378 = vmul.f32 %v375, %v377
        %v379 = vadd.f32 %v375, %v378
        %vm380 = vweird.f32 %v309
        %vm381 = vweird.f32 %v375
        %vm382 = vmor %vm380, %vm381
        %v383 = vsel %vm382, %v375, %v379
        %v384 = vand.u32 2147483647, %v309
        %vm385 = vcmp.eq.f32.partialorder %v384, 8.507059e+37
        %v386 = vand.u32 %v309, 2147483648
        %v387 = vor.u32 1.1754944e-38, %v386
        %v388 = vsel %vm385, %v387, %v383
        %v389 = vmul.f32 %v330, %v388
        %v390 = vsub.f32 1.0, %v374
        %v391 = vsub.f32 1.0, %v389
        %v392 = vmul.f32 %v390, %v390
        %v393 = vmul.f32 %v391, %v391
        %v394 = vsub.f32 0.0, %v392
        %v395 = vsub.f32 0.0, %v393
        %v396 = vmul.f32 %v394, %v358
        %v397 = vmul.f32 %v395, %v359
        %v398 = vld [vmem:[#allocation2] sm:$0x3]
        %v401 = vrot.slane %v397, 7
        %vm402 = vcmask 1040384
        %v403 = vsel %vm402, %v396, %v401
        %v405 = vadd.f32 %v398, %v403
        %v406 = vlaneseq
        %vm407 = vcmp.ge.s32.totalorder %v406, 0
        %vm408 = vcmp.lt.s32.totalorder %v406, 256
        %vm409 = vmand %vm407, %vm408
        %410 = vst.msk [vmem:[#allocation2] sm:$0x3] %vm409, %v405
        // Predicated region
        $region41: #{tpu_custom_call.1} parent=27 // pred_check
          %p411 = pneg %p244
        $region42: #{tpu_custom_call.1} parent=27 // pred_check_branch
          %413 = sbr.rel (%p411) target = $region44
        $region43: #{tpu_custom_call.1} parent=27 // pred_region
          %v414 = vld [vmem:[#allocation2] sm:$0x3]
          %v416 = vperm.slane %v414, 0
          %v417 = vperm.slane %v414, 1
          %v420 = vsel %vm402, %v416, 0.0
          %v421 = vsel %vm402, %v417, 0.0
          %v422 = vadd.f32 %v420, %v421
          %423 = vadd.xlane.f32.xlu0 %v422
          %v424 = vpop.xlane.xlu0 %423
          %v425 = vmul.f32 %v424, 0.001953125
          %vm426 = vcmask 0
          %427 = vst.msk [vmem:[%s243] sm:$0x1] %vm426, %v425
        $region44: #{tpu_custom_call.1} parent=27 // pred_fallthru
          _
        %p428 = scmp.lt.s32.totalorder %s24, 1
        %s429 = scalar_select %p428, %s24, 1
        %p430 = scmp.lt.s32.totalorder %s25, 0
        %s431 = scalar_select %p430, %s25, 0
        %s432 = sadd.s32 %s431, %s429
        %s433 = scalar_lea.vmem %s2, %s432
        // Predicated region
        $region45: #{tpu_custom_call.1} parent=27 // pred_check
          %p434 = pneg %p118
        $region46: #{tpu_custom_call.1} parent=27 // pred_check_branch
          %436 = sbr.rel (%p434) target = $region48
        $region47: #{tpu_custom_call.1} parent=27 // pred_region
          _
        $region48: #{tpu_custom_call.1} parent=27 // pred_fallthru
          _
      $region28: #{tpu_custom_call.1} parent=5 // pred_fallthru
        _
      %p437 = scmp.le.s32.totalorder 2, %s14
      // Predicated region
      $region49: #{tpu_custom_call.1} parent=5 // pred_check
        %p438 = pneg %p437
      $region50: #{tpu_custom_call.1} parent=5 // pred_check_branch
        %440 = sbr.rel (%p438) target = $region52
      $region51: #{tpu_custom_call.1} parent=5 // pred_region
        %s441 = ssub.s32 %s14, 2
        // Predicated region
        $region53: #{tpu_custom_call.1} parent=51 // pred_check
          %p442 = pneg %p124
        $region54: #{tpu_custom_call.1} parent=51 // pred_check_branch
          %444 = sbr.rel (%p442) target = $region56
        $region55: #{tpu_custom_call.1} parent=51 // pred_region
          %p445 = scmp.lt.s32.totalorder %s27, 1
          %s446 = scalar_select %p445, %s27, 1
          %p447 = scmp.lt.s32.totalorder %s28, 0
          %s448 = scalar_select %p447, %s28, 0
          %s449 = sadd.s32 %s448, %s446
          %s450 = scalar_lea.vmem %s2, %s449
        $region56: #{tpu_custom_call.1} parent=51 // pred_fallthru
          _
      $region52: #{tpu_custom_call.1} parent=5 // pred_fallthru
        _
    $region6: #{tpu_custom_call.1} parent=1 // loop_footer
      %s18 = sadd.s32 1, %s14
    $region7: #{tpu_custom_call.1} parent=1 // loop_footer_branch
      %13 = sbr.rel target = $region3
    $region8: #{tpu_custom_call.1} parent=1 // loop_exit
      _
    %451 = vsyncpa [#allocation4], 1
    %s452 = scalar_lea.sflag [#allocation4], 1
    %453 = vsyncpa %s452, 1
    %454 = vsyncpa [#allocation6], 1
    %s455 = scalar_lea.sflag [#allocation6], 1
    %456 = vsyncpa %s455, 1

</llo_original>
